<compile_context>
chip_gen: v5e
topology: v5e:2x2
jax: 0.10.0
libtpu: 0.0.40
codegen_flags: <defaults>
</compile_context>

<pallas_src>
import jax
import jax.numpy as jnp
from jax.experimental import pallas as pl
from jax.experimental.pallas import tpu as pltpu


def _round_up(x, n):
    return ((x + n - 1) // n) * n


# ---------------------------------------------------------------------------
# Pallas kernel:  O_tile = sum_l Z_l_tile @ M_l   (contraction fully resident)
# ---------------------------------------------------------------------------
def _make_readout_kernel(num_levels):
    def kernel(*refs):
        z_refs = refs[:num_levels]
        m_refs = refs[num_levels:2 * num_levels]
        o_ref = refs[2 * num_levels]
        acc = jnp.dot(z_refs[0][...], m_refs[0][...],
                      preferred_element_type=jnp.float32)
        for l in range(1, num_levels):
            acc = acc + jnp.dot(z_refs[l][...], m_refs[l][...],
                                preferred_element_type=jnp.float32)
        o_ref[...] = acc
    return kernel


def readout_matmul(z_parts, m_parts, bias, *, tm=256):
    """y = sum_l z_l @ m_l + bias.

    z_parts: list of (B, K_l) arrays.  m_parts: list of (K_l, O).  bias: (O,).
    Returns (B, O) float32.
    """
    B = z_parts[0].shape[0]
    O = m_parts[0].shape[1]
    L = len(z_parts)

    tm_eff = min(tm, _round_up(B, 8))           # row tile, multiple of 8
    Bp = _round_up(B, tm_eff)                   # padded row count
    Op = _round_up(O, 128)                      # lane-dense output width

    zs = []
    for zl in z_parts:
        zl = zl.astype(jnp.bfloat16)            # halve HBM bytes of big stream
        if Bp != B:
            zl = jnp.pad(zl, ((0, Bp - B), (0, 0)))
        zs.append(zl)
    ms = []
    for ml in m_parts:
        ml = ml.astype(jnp.bfloat16)
        if Op != O:
            ml = jnp.pad(ml, ((0, 0), (0, Op - O)))
        ms.append(ml)

    in_specs = (
        # Z_l: tiled over rows, full K_l extent on lanes (K_l == full dim).
        [pl.BlockSpec((tm_eff, zl.shape[1]), lambda i: (i, 0)) for zl in zs]
        # M_l: whole matrix, constant across the B grid (not re-fetched).
        + [pl.BlockSpec((ml.shape[0], Op), lambda i: (0, 0)) for ml in ms]
    )

    y = pl.pallas_call(
        _make_readout_kernel(L),
        out_shape=jax.ShapeDtypeStruct((Bp, Op), jnp.float32),
        grid_spec=pltpu.PrefetchScalarGridSpec(
            num_scalar_prefetch=0,
            grid=(Bp // tm_eff,),
            in_specs=in_specs,
            out_specs=pl.BlockSpec((tm_eff, Op), lambda i: (i, 0)),
        ),
        compiler_params=pltpu.CompilerParams(
            dimension_semantics=("parallel",)),
    )(*zs, *ms)

    # Tiny epilogue in the wrapper: strip padding, add bias.
    return y[:B, :O] + bias[None, :].astype(jnp.float32)


# ---------------------------------------------------------------------------
# Plain-JAX glue (parameter setup / cheap linear-operator construction).
# ---------------------------------------------------------------------------
def avg_pool_2x2(z):
    """nn.AvgPool2d(kernel_size=2, stride=2, count_include_pad=False)."""
    B, C, H, W = z.shape
    Ho, Wo = H // 2, W // 2
    z = z[:, :, :2 * Ho, :2 * Wo]
    return z.reshape(B, C, Ho, 2, Wo, 2).mean(axis=(3, 5))


def bilinear_sample_matrix(gx, gy, H, W):
    """Dense (H*W, O) matrix equivalent of F.grid_sample (bilinear,
    padding_mode='zeros', align_corners=False) at O sample points."""
    ix = ((gx + 1.0) * W - 1.0) / 2.0
    iy = ((gy + 1.0) * H - 1.0) / 2.0
    ix0 = jnp.floor(ix)
    iy0 = jnp.floor(iy)
    fx = ix - ix0
    fy = iy - iy0
    mat = jnp.zeros((H * W, gx.shape[0]), jnp.float32)
    for dy, wy in ((0, 1.0 - fy), (1, fy)):
        for dx, wx in ((0, 1.0 - fx), (1, fx)):
            cx = ix0 + dx
            cy = iy0 + dy
            valid = ((cx >= 0) & (cx < W) & (cy >= 0) & (cy < H)).astype(jnp.float32)
            wgt = wx * wy * valid
            p = (jnp.clip(cy, 0, H - 1) * W + jnp.clip(cx, 0, W - 1)).astype(jnp.int32)
            mat = mat + jax.nn.one_hot(p, H * W, dtype=jnp.float32).T * wgt[None, :]
    return mat


def spatial_transformer_pooled3d_forward(x, grid_param, features, bias, pool_steps):
    """Default-path forward of SpatialTransformerPooled3d (shift/subs_idx None)."""
    N, c, t, w, h = x.shape
    m = pool_steps + 1
    outdims = features.shape[-1]

    g = jnp.clip(grid_param, -1.0, 1.0)         # module clamps grid to [-1, 1]
    gx = g[0, :, 0, 0]                          # x -> last spatial axis (h / W_in)
    gy = g[0, :, 0, 1]                          # y -> second spatial axis (w / H_in)
    feat = features.reshape(m * c, outdims).astype(jnp.float32)  # mask all-ones

    # (N, c, t, w, h) -> (N*t, c, w, h); the bf16 cast in readout_matmul fuses
    # with this transpose so the transposed slab is written once, in half-width.
    z = jnp.transpose(x, (0, 2, 1, 3, 4)).reshape(N * t, c, w, h)

    z_parts, m_parts = [], []
    cur = z
    for level in range(m):
        B_, C_, H_, W_ = cur.shape
        samp = bilinear_sample_matrix(gx, gy, H_, W_)           # (H*W, O)
        feat_l = feat[level * c:(level + 1) * c]                # (c, O)
        m_l = (feat_l[:, None, :] * samp[None, :, :]).reshape(C_ * H_ * W_, outdims)
        z_parts.append(cur.reshape(B_, C_ * H_ * W_))
        m_parts.append(m_l)
        if level + 1 < m:
            cur = avg_pool_2x2(cur)

    y = readout_matmul(z_parts, m_parts, bias)  # Pallas hot path
    return y.reshape(N, t, outdims)


# ---------------------------------------------------------------------------
# Independent pure-JAX reference (direct bilinear gather, like F.grid_sample).
# ---------------------------------------------------------------------------
def _ref_forward(x, grid_param, features, bias, pool_steps):
    N, c, t, w, h = x.shape
    m = pool_steps + 1
    outdims = features.shape[-1]
    g = jnp.clip(grid_param, -1.0, 1.0)
    gx = g[0, :, 0, 0]
    gy = g[0, :, 0, 1]
    feat = features.reshape(m * c, outdims)
    z = jnp.transpose(x, (0, 2, 1, 3, 4)).reshape(N * t, c, w, h)

    def grid_sample(zz):
        B_, C_, H_, W_ = zz.shape
        ix = ((gx + 1.0) * W_ - 1.0) / 2.0
        iy = ((gy + 1.0) * H_ - 1.0) / 2.0
        ix0 = jnp.floor(ix)
        iy0 = jnp.floor(iy)
        fx = ix - ix0
        fy = iy - iy0
        out = jnp.zeros((B_, C_, outdims), jnp.float32)
        for dy, wy in ((0, 1.0 - fy), (1, fy)):
            for dx, wx in ((0, 1.0 - fx), (1, fx)):
                cx = ix0 + dx
                cy = iy0 + dy
                valid = ((cx >= 0) & (cx < W_) & (cy >= 0) & (cy < H_)).astype(jnp.float32)
                vals = zz[:, :,
                          jnp.clip(cy, 0, H_ - 1).astype(jnp.int32),
                          jnp.clip(cx, 0, W_ - 1).astype(jnp.int32)]
                out = out + vals * (wx * wy * valid)[None, None, :]
        return out

    pools = [grid_sample(z)]
    cur = z
    for _ in range(pool_steps):
        cur = avg_pool_2x2(cur)
        pools.append(grid_sample(cur))
    y = jnp.concatenate(pools, axis=1)          # (B, m*c, O)
    y = (y * feat[None]).sum(axis=1) + bias[None]
    return y.reshape(N, t, outdims)


if __name__ == "__main__":
    # Module config (in_shape = (c, t, w, h))
    N, c, t, w, h = 2, 4, 5, 16, 16
    outdims = 8
    pool_steps = 1
    init_range = 0.05
    m = pool_steps + 1

    key = jax.random.PRNGKey(0)
    kx, kg = jax.random.split(key)

    # Deterministic parameter init, matching Module.__init__/initialize():
    #   features.fill_(1/c), bias.fill_(0), grid ~ U(-init_range, init_range)
    features = jnp.full((1, c * m, 1, outdims), 1.0 / c, dtype=jnp.float32)
    bias = jnp.zeros((outdims,), dtype=jnp.float32)
    grid_param = jax.random.uniform(kg, (1, outdims, 1, 2), jnp.float32,
                                    minval=-init_range, maxval=init_range)

    x = jax.random.normal(kx, (N, c, t, w, h), dtype=jnp.float32)

    y = spatial_transformer_pooled3d_forward(x, grid_param, features, bias, pool_steps)
    y = jax.block_until_ready(y)

    y_ref = jax.block_until_ready(_ref_forward(x, grid_param, features, bias, pool_steps))

    assert y.shape == (N, t, outdims), y.shape
    # bf16 inputs (f32 accumulation) -> relaxed tolerance vs the f32 reference.
    assert jnp.allclose(y, y_ref, rtol=3e-2, atol=3e-2), float(jnp.max(jnp.abs(y - y_ref)))

    print("KERNEL_OK")
</pallas_src>

<mosaic_0001>
module attributes {stable_mosaic.version = 11 : i64} {
  func.func @kernel(%arg0: i32, %arg1: memref<16x1024xbf16, #tpu.memory_space<vmem>>, %arg2: memref<16x256xbf16, #tpu.memory_space<vmem>>, %arg3: memref<1024x128xbf16, #tpu.memory_space<vmem>>, %arg4: memref<256x128xbf16, #tpu.memory_space<vmem>>, %arg5: memref<16x128xf32, #tpu.memory_space<vmem>>) attributes {dimension_semantics = [#tpu.dimension_semantics<parallel>], iteration_bounds = array<i64: 1>, scalar_prefetch = 0 : i64, scratch_operands = 0 : i64, tpu.core_type = #tpu.core_type<tc>, window_params = [{transform_indices = @transform_0, window_bounds = array<i64: 16, 1024>}, {transform_indices = @transform_1, window_bounds = array<i64: 16, 256>}, {pipeline_mode = #tpu.pipeline_mode<synchronous>, transform_indices = @transform_2, window_bounds = array<i64: 1024, 128>}, {pipeline_mode = #tpu.pipeline_mode<synchronous>, transform_indices = @transform_3, window_bounds = array<i64: 256, 128>}, {transform_indices = @transform_4, window_bounds = array<i64: 16, 128>}]} {
    %c0 = arith.constant 0 : index
    %c0_0 = arith.constant 0 : index
    %0 = vector.load %arg1[%c0, %c0_0] : memref<16x1024xbf16, #tpu.memory_space<vmem>>, vector<16x1024xbf16>
    %c0_1 = arith.constant 0 : index
    %c0_2 = arith.constant 0 : index
    %1 = vector.load %arg3[%c0_1, %c0_2] : memref<1024x128xbf16, #tpu.memory_space<vmem>>, vector<1024x128xbf16>
    %cst = arith.constant dense<0.000000e+00> : vector<16x128xf32>
    %2 = tpu.matmul %0, %1, %cst {dimension_numbers = #tpu.dot_dimension_numbers<[1], [0], [0], [1], [0, 0, 1, 1], [], []>} : vector<16x1024xbf16>, vector<1024x128xbf16>, vector<16x128xf32> -> vector<16x128xf32>
    %c0_3 = arith.constant 0 : index
    %c0_4 = arith.constant 0 : index
    %3 = vector.load %arg2[%c0_3, %c0_4] : memref<16x256xbf16, #tpu.memory_space<vmem>>, vector<16x256xbf16>
    %c0_5 = arith.constant 0 : index
    %c0_6 = arith.constant 0 : index
    %4 = vector.load %arg4[%c0_5, %c0_6] : memref<256x128xbf16, #tpu.memory_space<vmem>>, vector<256x128xbf16>
    %cst_7 = arith.constant dense<0.000000e+00> : vector<16x128xf32>
    %5 = tpu.matmul %3, %4, %cst_7 {dimension_numbers = #tpu.dot_dimension_numbers<[1], [0], [0], [1], [0, 0, 1, 1], [], []>} : vector<16x256xbf16>, vector<256x128xbf16>, vector<16x128xf32> -> vector<16x128xf32>
    %6 = arith.addf %2, %5 : vector<16x128xf32>
    %c0_8 = arith.constant 0 : index
    %c0_9 = arith.constant 0 : index
    %7 = vector.load %arg5[%c0_8, %c0_9] : memref<16x128xf32, #tpu.memory_space<vmem>>, vector<16x128xf32>
    tpu.vector_store %arg5[%c0_8, %c0_9], %6 {strides = array<i32>} : memref<16x128xf32, #tpu.memory_space<vmem>>, vector<16x128xf32>,
    return
  }
  func.func @transform_0(%arg0: i32) -> (i32, i32) {
    %c0_i32 = arith.constant 0 : i32
    %c0_i32_0 = arith.constant 0 : i32
    return %arg0, %c0_i32 : i32, i32
  }
  func.func @transform_1(%arg0: i32) -> (i32, i32) {
    %c0_i32 = arith.constant 0 : i32
    %c0_i32_0 = arith.constant 0 : i32
    return %arg0, %c0_i32 : i32, i32
  }
  func.func @transform_2(%arg0: i32) -> (i32, i32) {
    %c0_i32 = arith.constant 0 : i32
    %c0_i32_0 = arith.constant 0 : i32
    %c0_i32_1 = arith.constant 0 : i32
    return %c0_i32, %c0_i32_0 : i32, i32
  }
  func.func @transform_3(%arg0: i32) -> (i32, i32) {
    %c0_i32 = arith.constant 0 : i32
    %c0_i32_0 = arith.constant 0 : i32
    %c0_i32_1 = arith.constant 0 : i32
    return %c0_i32, %c0_i32_0 : i32, i32
  }
  func.func @transform_4(%arg0: i32) -> (i32, i32) {
    %c0_i32 = arith.constant 0 : i32
    %c0_i32_0 = arith.constant 0 : i32
    return %arg0, %c0_i32 : i32, i32
  }
}

</mosaic_0001>

<llo_original>
// kernel: tpu_custom_call.1
$region0: #{tpu_custom_call.1}
  #allocation0 [shape = 'u32[]', space=smem, size = 0x4, offset = 0x4, fixed_abs, tag = 'smem constant byte address 0x4 - core index']
  #allocation1 [shape = 'u32[72,128]{1,0:T(1,128)}', space=vmem, size = 0x9000, scoped, tag = 'internal scratch']
  %s0 = inlined_call_operand.hbm [shape: bf16[16,1024], index: 0, kind: input, shape index: {}]
  %s1 = inlined_call_operand.hbm [shape: bf16[16,256], index: 1, kind: input, shape index: {}]
  %s2 = inlined_call_operand.hbm [shape: bf16[1024,128], index: 2, kind: input, shape index: {}]
  %s3 = inlined_call_operand.hbm [shape: bf16[256,128], index: 3, kind: input, shape index: {}]
  %s4 = inlined_call_operand.hbm [shape: f32[16,128], index: 4, kind: output, shape index: {}]
  %s5 = sld [smem:[#allocation0]]
  $region42: #{tpu_custom_call.1} parent=0
    _
  %s7 = ssub.s32 1, %s5
  %s8 = scalar_select 0, %s7, %s5
  $region1: #{tpu_custom_call.1} parent=0
    #allocation2 [shape = 'u8[32768]{0}', space=vmem, size = 0x8000, scoped, tag = 'input window, operand 0, single buffered']
    #allocation3 [shape = 's32[1]{0}', space=sflag, size = 0x4, scoped, tag = 'scoped memory for tpu_custom_call.1']
    #allocation4 [shape = 's32[1]{0}', space=sflag, size = 0x4, scoped, tag = 'scoped memory for tpu_custom_call.1']
    #allocation5 [shape = 'u8[8192]{0}', space=vmem, size = 0x2000, scoped, tag = 'input window, operand 1, single buffered']
    #allocation6 [shape = 's32[1]{0}', space=sflag, size = 0x4, scoped, tag = 'scoped memory for tpu_custom_call.1']
    #allocation7 [shape = 'u8[262144]{0}', space=vmem, size = 0x40000, scoped, tag = 'input window, operand 2, single buffered']
    #allocation8 [shape = 'u8[65536]{0}', space=vmem, size = 0x10000, scoped, tag = 'input window, operand 3, single buffered']
    #allocation9 [shape = 's32[1]{0}', space=sflag, size = 0x4, scoped, tag = 'scoped memory for tpu_custom_call.1']
    #allocation10 [shape = 'u8[8192]{0}', space=vmem, size = 0x2000, scoped, tag = 'output window, operand 0, single buffered']
    %9 = vsyncpa [#allocation3], 0
    %10 = vsyncpa [#allocation6], 0
    %11 = vsyncpa [#allocation9], 0
    %12 = vsyncpa [#allocation4], 0
    // Predicated region
    $region2: #{tpu_custom_call.1} parent=1 // pred_check
      _
    $region3: #{tpu_custom_call.1} parent=1 // pred_check_branch
      %14 = sbr.rel (0) target = $region5
    $region4: #{tpu_custom_call.1} parent=1 // pred_region
      %16 = vsyncadd [#allocation3], 0
      %s17 = sshll.u32 %s0, 4
      %s18 = int_to_ptr.hbm [resolvable:$true] %s17
      %s19 = sshll.u32 [#allocation2], 4
      %s20 = int_to_ptr.vmem [resolvable:$true] %s19
      %25 = dma.hbm_to_vmem [thread:$0]  %s18, 1024, %s20, [#allocation3], 512, 512, 32
    $region5: #{tpu_custom_call.1} parent=1 // pred_fallthru
      _
    // Predicated region
    $region6: #{tpu_custom_call.1} parent=1 // pred_check
      _
    $region7: #{tpu_custom_call.1} parent=1 // pred_check_branch
      %27 = sbr.rel (0) target = $region9
    $region8: #{tpu_custom_call.1} parent=1 // pred_region
      %29 = vsyncadd [#allocation6], 0
      %s30 = sshll.u32 %s1, 4
      %s31 = int_to_ptr.hbm [resolvable:$true] %s30
      %s32 = sshll.u32 [#allocation5], 4
      %s33 = int_to_ptr.vmem [resolvable:$true] %s32
      %38 = dma.hbm_to_vmem [thread:$0]  %s31, 256, %s33, [#allocation6], 128, 128, 8
    $region9: #{tpu_custom_call.1} parent=1 // pred_fallthru
      _
    // Predicated region
    $region10: #{tpu_custom_call.1} parent=1 // pred_check
      _
    $region11: #{tpu_custom_call.1} parent=1 // pred_check_branch
      %40 = sbr.rel (0) target = $region13
    $region12: #{tpu_custom_call.1} parent=1 // pred_region
      %42 = vsyncadd [#allocation6], 0
      %s43 = sshll.u32 %s2, 4
      %s44 = int_to_ptr.hbm [resolvable:$true] %s43
      %s45 = sshll.u32 [#allocation7], 4
      %s46 = int_to_ptr.vmem [resolvable:$true] %s45
      %51 = dma.hbm_to_vmem [thread:$0]  %s44, 8192, %s46, [#allocation6], 64, 64, 4
    $region13: #{tpu_custom_call.1} parent=1 // pred_fallthru
      _
    // Predicated region
    $region14: #{tpu_custom_call.1} parent=1 // pred_check
      _
    $region15: #{tpu_custom_call.1} parent=1 // pred_check_branch
      %53 = sbr.rel (0) target = $region17
    $region16: #{tpu_custom_call.1} parent=1 // pred_region
      %55 = vsyncadd [#allocation9], 0
      %s56 = sshll.u32 %s3, 4
      %s57 = int_to_ptr.hbm [resolvable:$true] %s56
      %s58 = sshll.u32 [#allocation8], 4
      %s59 = int_to_ptr.vmem [resolvable:$true] %s58
      %64 = dma.hbm_to_vmem [thread:$0]  %s57, 2048, %s59, [#allocation9], 64, 64, 4
    $region17: #{tpu_custom_call.1} parent=1 // pred_fallthru
      _
    // Predicated region
    $region18: #{tpu_custom_call.1} parent=1 // pred_check
      _
    $region19: #{tpu_custom_call.1} parent=1 // pred_check_branch
      %66 = sbr.rel (0) target = $region21
    $region20: #{tpu_custom_call.1} parent=1 // pred_region
      %68 = dma.done [#allocation3], 1024
    $region21: #{tpu_custom_call.1} parent=1 // pred_fallthru
      _
    // Predicated region
    $region22: #{tpu_custom_call.1} parent=1 // pred_check
      _
    $region23: #{tpu_custom_call.1} parent=1 // pred_check_branch
      %70 = sbr.rel (0) target = $region25
    $region24: #{tpu_custom_call.1} parent=1 // pred_region
      %72 = dma.done [#allocation6], 256
    $region25: #{tpu_custom_call.1} parent=1 // pred_fallthru
      _
    // Predicated region
    $region26: #{tpu_custom_call.1} parent=1 // pred_check
      _
    $region27: #{tpu_custom_call.1} parent=1 // pred_check_branch
      %74 = sbr.rel (0) target = $region29
    $region28: #{tpu_custom_call.1} parent=1 // pred_region
      %76 = dma.done [#allocation6], 8192
    $region29: #{tpu_custom_call.1} parent=1 // pred_fallthru
      _
    // Predicated region
    $region30: #{tpu_custom_call.1} parent=1 // pred_check
      _
    $region31: #{tpu_custom_call.1} parent=1 // pred_check_branch
      %78 = sbr.rel (0) target = $region33
    $region32: #{tpu_custom_call.1} parent=1 // pred_region
      %80 = dma.done [#allocation9], 2048
    $region33: #{tpu_custom_call.1} parent=1 // pred_fallthru
      _
    %v81 = vld [vmem:[#allocation2] sm:$0xff]
    %v82 = vld [vmem:[#allocation2 + $0x8] sm:$0xff]
    %v83 = vld [vmem:[#allocation2 + $0x10] sm:$0xff]
    %v84 = vld [vmem:[#allocation2 + $0x18] sm:$0xff]
    %v85 = vld [vmem:[#allocation2 + $0x20] sm:$0xff]
    %v86 = vld [vmem:[#allocation2 + $0x28] sm:$0xff]
    %v87 = vld [vmem:[#allocation2 + $0x30] sm:$0xff]
    %v88 = vld [vmem:[#allocation2 + $0x38] sm:$0xff]
    %v89 = vld [vmem:[#allocation7] sm:$0xf]
    %v90 = vld [vmem:[#allocation7 + $0x4] sm:$0xf]
    %v91 = vld [vmem:[#allocation7 + $0x8] sm:$0xf]
    %v92 = vld [vmem:[#allocation7 + $0xc] sm:$0xf]
    %v93 = vld [vmem:[#allocation7 + $0x10] sm:$0xf]
    %v94 = vld [vmem:[#allocation7 + $0x14] sm:$0xf]
    %v95 = vld [vmem:[#allocation7 + $0x18] sm:$0xf]
    %v96 = vld [vmem:[#allocation7 + $0x1c] sm:$0xf]
    %v97 = vld [vmem:[#allocation7 + $0x20] sm:$0xf]
    %v98 = vld [vmem:[#allocation7 + $0x24] sm:$0xf]
    %v99 = vld [vmem:[#allocation7 + $0x28] sm:$0xf]
    %v100 = vld [vmem:[#allocation7 + $0x2c] sm:$0xf]
    %v101 = vld [vmem:[#allocation7 + $0x30] sm:$0xf]
    %v102 = vld [vmem:[#allocation7 + $0x34] sm:$0xf]
    %v103 = vld [vmem:[#allocation7 + $0x38] sm:$0xf]
    %v104 = vld [vmem:[#allocation7 + $0x3c] sm:$0xf]
    %v105 = vld [vmem:[#allocation7 + $0x40] sm:$0xf]
    %v106 = vld [vmem:[#allocation7 + $0x44] sm:$0xf]
    %v107 = vld [vmem:[#allocation7 + $0x48] sm:$0xf]
    %v108 = vld [vmem:[#allocation7 + $0x4c] sm:$0xf]
    %v109 = vld [vmem:[#allocation7 + $0x50] sm:$0xf]
    %v110 = vld [vmem:[#allocation7 + $0x54] sm:$0xf]
    %v111 = vld [vmem:[#allocation7 + $0x58] sm:$0xf]
    %v112 = vld [vmem:[#allocation7 + $0x5c] sm:$0xf]
    %v113 = vld [vmem:[#allocation7 + $0x60] sm:$0xf]
    %v114 = vld [vmem:[#allocation7 + $0x64] sm:$0xf]
    %v115 = vld [vmem:[#allocation7 + $0x68] sm:$0xf]
    %v116 = vld [vmem:[#allocation7 + $0x6c] sm:$0xf]
    %v117 = vld [vmem:[#allocation7 + $0x70] sm:$0xf]
    %v118 = vld [vmem:[#allocation7 + $0x74] sm:$0xf]
    %v119 = vld [vmem:[#allocation7 + $0x78] sm:$0xf]
    %v120 = vld [vmem:[#allocation7 + $0x7c] sm:$0xf]
    %v121 = vld [vmem:[#allocation7 + $0x80] sm:$0xf]
    %v122 = vld [vmem:[#allocation7 + $0x84] sm:$0xf]
    %v123 = vld [vmem:[#allocation7 + $0x88] sm:$0xf]
    %v124 = vld [vmem:[#allocation7 + $0x8c] sm:$0xf]
    %v125 = vld [vmem:[#allocation7 + $0x90] sm:$0xf]
    %v126 = vld [vmem:[#allocation7 + $0x94] sm:$0xf]
    %v127 = vld [vmem:[#allocation7 + $0x98] sm:$0xf]
    %v128 = vld [vmem:[#allocation7 + $0x9c] sm:$0xf]
    %v129 = vld [vmem:[#allocation7 + $0xa0] sm:$0xf]
    %v130 = vld [vmem:[#allocation7 + $0xa4] sm:$0xf]
    %v131 = vld [vmem:[#allocation7 + $0xa8] sm:$0xf]
    %v132 = vld [vmem:[#allocation7 + $0xac] sm:$0xf]
    %v133 = vld [vmem:[#allocation7 + $0xb0] sm:$0xf]
    %v134 = vld [vmem:[#allocation7 + $0xb4] sm:$0xf]
    %v135 = vld [vmem:[#allocation7 + $0xb8] sm:$0xf]
    %v136 = vld [vmem:[#allocation7 + $0xbc] sm:$0xf]
    %v137 = vld [vmem:[#allocation7 + $0xc0] sm:$0xf]
    %v138 = vld [vmem:[#allocation7 + $0xc4] sm:$0xf]
    %v139 = vld [vmem:[#allocation7 + $0xc8] sm:$0xf]
    %v140 = vld [vmem:[#allocation7 + $0xcc] sm:$0xf]
    %v141 = vld [vmem:[#allocation7 + $0xd0] sm:$0xf]
    %v142 = vld [vmem:[#allocation7 + $0xd4] sm:$0xf]
    %v143 = vld [vmem:[#allocation7 + $0xd8] sm:$0xf]
    %v144 = vld [vmem:[#allocation7 + $0xdc] sm:$0xf]
    %v145 = vld [vmem:[#allocation7 + $0xe0] sm:$0xf]
    %v146 = vld [vmem:[#allocation7 + $0xe4] sm:$0xf]
    %v147 = vld [vmem:[#allocation7 + $0xe8] sm:$0xf]
    %v148 = vld [vmem:[#allocation7 + $0xec] sm:$0xf]
    %v149 = vld [vmem:[#allocation7 + $0xf0] sm:$0xf]
    %v150 = vld [vmem:[#allocation7 + $0xf4] sm:$0xf]
    %v151 = vld [vmem:[#allocation7 + $0xf8] sm:$0xf]
    %v152 = vld [vmem:[#allocation7 + $0xfc] sm:$0xf]
    %v153 = vld [vmem:[#allocation7 + $0x100] sm:$0xf]
    %v154 = vld [vmem:[#allocation7 + $0x104] sm:$0xf]
    %v155 = vld [vmem:[#allocation7 + $0x108] sm:$0xf]
    %v156 = vld [vmem:[#allocation7 + $0x10c] sm:$0xf]
    %v157 = vld [vmem:[#allocation7 + $0x110] sm:$0xf]
    %v158 = vld [vmem:[#allocation7 + $0x114] sm:$0xf]
    %v159 = vld [vmem:[#allocation7 + $0x118] sm:$0xf]
    %v160 = vld [vmem:[#allocation7 + $0x11c] sm:$0xf]
    %v161 = vld [vmem:[#allocation7 + $0x120] sm:$0xf]
    %v162 = vld [vmem:[#allocation7 + $0x124] sm:$0xf]
    %v163 = vld [vmem:[#allocation7 + $0x128] sm:$0xf]
    %v164 = vld [vmem:[#allocation7 + $0x12c] sm:$0xf]
    %v165 = vld [vmem:[#allocation7 + $0x130] sm:$0xf]
    %v166 = vld [vmem:[#allocation7 + $0x134] sm:$0xf]
    %v167 = vld [vmem:[#allocation7 + $0x138] sm:$0xf]
    %v168 = vld [vmem:[#allocation7 + $0x13c] sm:$0xf]
    %v169 = vld [vmem:[#allocation7 + $0x140] sm:$0xf]
    %v170 = vld [vmem:[#allocation7 + $0x144] sm:$0xf]
    %v171 = vld [vmem:[#allocation7 + $0x148] sm:$0xf]
    %v172 = vld [vmem:[#allocation7 + $0x14c] sm:$0xf]
    %v173 = vld [vmem:[#allocation7 + $0x150] sm:$0xf]
    %v174 = vld [vmem:[#allocation7 + $0x154] sm:$0xf]
    %v175 = vld [vmem:[#allocation7 + $0x158] sm:$0xf]
    %v176 = vld [vmem:[#allocation7 + $0x15c] sm:$0xf]
    %v177 = vld [vmem:[#allocation7 + $0x160] sm:$0xf]
    %v178 = vld [vmem:[#allocation7 + $0x164] sm:$0xf]
    %v179 = vld [vmem:[#allocation7 + $0x168] sm:$0xf]
    %v180 = vld [vmem:[#allocation7 + $0x16c] sm:$0xf]
    %v181 = vld [vmem:[#allocation7 + $0x170] sm:$0xf]
    %v182 = vld [vmem:[#allocation7 + $0x174] sm:$0xf]
    %v183 = vld [vmem:[#allocation7 + $0x178] sm:$0xf]
    %v184 = vld [vmem:[#allocation7 + $0x17c] sm:$0xf]
    %v185 = vld [vmem:[#allocation7 + $0x180] sm:$0xf]
    %v186 = vld [vmem:[#allocation7 + $0x184] sm:$0xf]
    %v187 = vld [vmem:[#allocation7 + $0x188] sm:$0xf]
    %v188 = vld [vmem:[#allocation7 + $0x18c] sm:$0xf]
    %v189 = vld [vmem:[#allocation7 + $0x190] sm:$0xf]
    %v190 = vld [vmem:[#allocation7 + $0x194] sm:$0xf]
    %v191 = vld [vmem:[#allocation7 + $0x198] sm:$0xf]
    %v192 = vld [vmem:[#allocation7 + $0x19c] sm:$0xf]
    %v193 = vld [vmem:[#allocation7 + $0x1a0] sm:$0xf]
    %v194 = vld [vmem:[#allocation7 + $0x1a4] sm:$0xf]
    %v195 = vld [vmem:[#allocation7 + $0x1a8] sm:$0xf]
    %v196 = vld [vmem:[#allocation7 + $0x1ac] sm:$0xf]
    %v197 = vld [vmem:[#allocation7 + $0x1b0] sm:$0xf]
    %v198 = vld [vmem:[#allocation7 + $0x1b4] sm:$0xf]
    %v199 = vld [vmem:[#allocation7 + $0x1b8] sm:$0xf]
    %v200 = vld [vmem:[#allocation7 + $0x1bc] sm:$0xf]
    %v201 = vld [vmem:[#allocation7 + $0x1c0] sm:$0xf]
    %v202 = vld [vmem:[#allocation7 + $0x1c4] sm:$0xf]
    %v203 = vld [vmem:[#allocation7 + $0x1c8] sm:$0xf]
    %v204 = vld [vmem:[#allocation7 + $0x1cc] sm:$0xf]
    %v205 = vld [vmem:[#allocation7 + $0x1d0] sm:$0xf]
    %v206 = vld [vmem:[#allocation7 + $0x1d4] sm:$0xf]
    %v207 = vld [vmem:[#allocation7 + $0x1d8] sm:$0xf]
    %v208 = vld [vmem:[#allocation7 + $0x1dc] sm:$0xf]
    %v209 = vld [vmem:[#allocation7 + $0x1e0] sm:$0xf]
    %v210 = vld [vmem:[#allocation7 + $0x1e4] sm:$0xf]
    %v211 = vld [vmem:[#allocation7 + $0x1e8] sm:$0xf]
    %v212 = vld [vmem:[#allocation7 + $0x1ec] sm:$0xf]
    %v213 = vld [vmem:[#allocation7 + $0x1f0] sm:$0xf]
    %v214 = vld [vmem:[#allocation7 + $0x1f4] sm:$0xf]
    %v215 = vld [vmem:[#allocation7 + $0x1f8] sm:$0xf]
    %v216 = vld [vmem:[#allocation7 + $0x1fc] sm:$0xf]
    %v217 = vld [vmem:[#allocation5] sm:$0xff]
    %v218 = vld [vmem:[#allocation5 + $0x8] sm:$0xff]
    %v219 = vld [vmem:[#allocation8] sm:$0xf]
    %v220 = vld [vmem:[#allocation8 + $0x4] sm:$0xf]
    %v221 = vld [vmem:[#allocation8 + $0x8] sm:$0xf]
    %v222 = vld [vmem:[#allocation8 + $0xc] sm:$0xf]
    %v223 = vld [vmem:[#allocation8 + $0x10] sm:$0xf]
    %v224 = vld [vmem:[#allocation8 + $0x14] sm:$0xf]
    %v225 = vld [vmem:[#allocation8 + $0x18] sm:$0xf]
    %v226 = vld [vmem:[#allocation8 + $0x1c] sm:$0xf]
    %v227 = vld [vmem:[#allocation8 + $0x20] sm:$0xf]
    %v228 = vld [vmem:[#allocation8 + $0x24] sm:$0xf]
    %v229 = vld [vmem:[#allocation8 + $0x28] sm:$0xf]
    %v230 = vld [vmem:[#allocation8 + $0x2c] sm:$0xf]
    %v231 = vld [vmem:[#allocation8 + $0x30] sm:$0xf]
    %v232 = vld [vmem:[#allocation8 + $0x34] sm:$0xf]
    %v233 = vld [vmem:[#allocation8 + $0x38] sm:$0xf]
    %v234 = vld [vmem:[#allocation8 + $0x3c] sm:$0xf]
    %v235 = vld [vmem:[#allocation8 + $0x40] sm:$0xf]
    %v236 = vld [vmem:[#allocation8 + $0x44] sm:$0xf]
    %v237 = vld [vmem:[#allocation8 + $0x48] sm:$0xf]
    %v238 = vld [vmem:[#allocation8 + $0x4c] sm:$0xf]
    %v239 = vld [vmem:[#allocation8 + $0x50] sm:$0xf]
    %v240 = vld [vmem:[#allocation8 + $0x54] sm:$0xf]
    %v241 = vld [vmem:[#allocation8 + $0x58] sm:$0xf]
    %v242 = vld [vmem:[#allocation8 + $0x5c] sm:$0xf]
    %v243 = vld [vmem:[#allocation8 + $0x60] sm:$0xf]
    %v244 = vld [vmem:[#allocation8 + $0x64] sm:$0xf]
    %v245 = vld [vmem:[#allocation8 + $0x68] sm:$0xf]
    %v246 = vld [vmem:[#allocation8 + $0x6c] sm:$0xf]
    %v247 = vld [vmem:[#allocation8 + $0x70] sm:$0xf]
    %v248 = vld [vmem:[#allocation8 + $0x74] sm:$0xf]
    %v249 = vld [vmem:[#allocation8 + $0x78] sm:$0xf]
    %v250 = vld [vmem:[#allocation8 + $0x7c] sm:$0xf]
    %v253 = vunpack.c.l.b16 %v217
    %v254 = vunpack.c.h.b16 %v217
    %v255 = vunpack.c.l.b16 %v218
    %v256 = vunpack.c.h.b16 %v218
    %v257 = vpack.c.b16 %v255, %v253
    %v258 = vpack.c.b16 %v256, %v254
    %v293 = vunpack.c.l.b16 %v219
    %v294 = vunpack.c.l.b16 %v220
    %v295 = vunpack.c.l.b16 %v221
    %v296 = vunpack.c.l.b16 %v222
    %v297 = vunpack.c.l.b16 %v223
    %v298 = vunpack.c.l.b16 %v224
    %v299 = vunpack.c.l.b16 %v225
    %v300 = vunpack.c.l.b16 %v226
    %v301 = vunpack.c.l.b16 %v227
    %v302 = vunpack.c.l.b16 %v228
    %v303 = vunpack.c.l.b16 %v229
    %v304 = vunpack.c.l.b16 %v230
    %v305 = vunpack.c.l.b16 %v231
    %v306 = vunpack.c.l.b16 %v232
    %v307 = vunpack.c.l.b16 %v233
    %v308 = vunpack.c.l.b16 %v234
    %v309 = vunpack.c.l.b16 %v235
    %v310 = vunpack.c.l.b16 %v236
    %v311 = vunpack.c.l.b16 %v237
    %v312 = vunpack.c.l.b16 %v238
    %v313 = vunpack.c.l.b16 %v239
    %v314 = vunpack.c.l.b16 %v240
    %v315 = vunpack.c.l.b16 %v241
    %v316 = vunpack.c.l.b16 %v242
    %v317 = vunpack.c.l.b16 %v243
    %v318 = vunpack.c.l.b16 %v244
    %v319 = vunpack.c.l.b16 %v245
    %v320 = vunpack.c.l.b16 %v246
    %v321 = vunpack.c.l.b16 %v247
    %v322 = vunpack.c.l.b16 %v248
    %v323 = vunpack.c.l.b16 %v249
    %v324 = vunpack.c.l.b16 %v250
    %v325 = vpack.c.b16 %v294, %v293
    %v326 = vpack.c.b16 %v296, %v295
    %v327 = vpack.c.b16 %v298, %v297
    %v328 = vpack.c.b16 %v300, %v299
    %v329 = vpack.c.b16 %v302, %v301
    %v330 = vpack.c.b16 %v304, %v303
    %v331 = vpack.c.b16 %v306, %v305
    %v332 = vpack.c.b16 %v308, %v307
    %v333 = vpack.c.b16 %v310, %v309
    %v334 = vpack.c.b16 %v312, %v311
    %v335 = vpack.c.b16 %v314, %v313
    %v336 = vpack.c.b16 %v316, %v315
    %v337 = vpack.c.b16 %v318, %v317
    %v338 = vpack.c.b16 %v320, %v319
    %v339 = vpack.c.b16 %v322, %v321
    %v340 = vpack.c.b16 %v324, %v323
    %357 = vmatpush.bf16.msra.mxu0 %v332
    %358 = vmatpush.bf16.msra.mxu0 %v331
    %359 = vmatpush.bf16.msra.mxu0 %v330
    %360 = vmatpush.bf16.msra.mxu0 %v329
    %361 = vmatpush.bf16.msra.mxu0 %v328
    %362 = vmatpush.bf16.msra.mxu0 %v327
    %363 = vmatpush.bf16.msra.mxu0 %v326
    %364 = vmatpush.bf16.msra.mxu0 %v325
    %365 = vmatmul.bf16.gmra.mxu0 %v257
    %v366 = vpop.f32.mrf.mxu0
    %v367 = vadd.f32 0.0, %v366
    %v368 = vpop.f32.mrf.mxu0
    %v369 = vadd.f32 0.0, %v368
    %370 = vdwg.mxu0
    %371 = vmatpush.bf16.msra.mxu0 %v340
    %372 = vmatpush.bf16.msra.mxu0 %v339
    %373 = vmatpush.bf16.msra.mxu0 %v338
    %374 = vmatpush.bf16.msra.mxu0 %v337
    %375 = vmatpush.bf16.msra.mxu0 %v336
    %376 = vmatpush.bf16.msra.mxu0 %v335
    %377 = vmatpush.bf16.msra.mxu0 %v334
    %378 = vmatpush.bf16.msra.mxu0 %v333
    %379 = vmatmul.bf16.gmra.mxu0 %v258
    %v380 = vpop.f32.mrf.mxu0
    %v381 = vadd.f32 %v367, %v380
    %v382 = vpop.f32.mrf.mxu0
    %v383 = vadd.f32 %v369, %v382
    %384 = vdwg.mxu0
    %v393 = vunpack.c.l.b16 %v81
    %v394 = vunpack.c.h.b16 %v81
    %v395 = vunpack.c.l.b16 %v82
    %v396 = vunpack.c.h.b16 %v82
    %v397 = vunpack.c.l.b16 %v83
    %v398 = vunpack.c.h.b16 %v83
    %v399 = vunpack.c.l.b16 %v84
    %v400 = vunpack.c.h.b16 %v84
    %v401 = vunpack.c.l.b16 %v85
    %v402 = vunpack.c.h.b16 %v85
    %v403 = vunpack.c.l.b16 %v86
    %v404 = vunpack.c.h.b16 %v86
    %v405 = vunpack.c.l.b16 %v87
    %v406 = vunpack.c.h.b16 %v87
    %v407 = vunpack.c.l.b16 %v88
    %v408 = vunpack.c.h.b16 %v88
    %v409 = vpack.c.b16 %v401, %v393
    %v410 = vpack.c.b16 %v402, %v394
    %v411 = vpack.c.b16 %v403, %v395
    %v412 = vpack.c.b16 %v404, %v396
    %v413 = vpack.c.b16 %v405, %v397
    %v414 = vpack.c.b16 %v406, %v398
    %v415 = vpack.c.b16 %v407, %v399
    %v416 = vpack.c.b16 %v408, %v400
    %v553 = vunpack.c.l.b16 %v89
    %v554 = vunpack.c.l.b16 %v90
    %v555 = vunpack.c.l.b16 %v91
    %v556 = vunpack.c.l.b16 %v92
    %v557 = vunpack.c.l.b16 %v93
    %v558 = vunpack.c.l.b16 %v94
    %v559 = vunpack.c.l.b16 %v95
    %v560 = vunpack.c.l.b16 %v96
    %v561 = vunpack.c.l.b16 %v97
    %v562 = vunpack.c.l.b16 %v98
    %v563 = vunpack.c.l.b16 %v99
    %v564 = vunpack.c.l.b16 %v100
    %v565 = vunpack.c.l.b16 %v101
    %v566 = vunpack.c.l.b16 %v102
    %v567 = vunpack.c.l.b16 %v103
    %v568 = vunpack.c.l.b16 %v104
    %v569 = vunpack.c.l.b16 %v105
    %v570 = vunpack.c.l.b16 %v106
    %v571 = vunpack.c.l.b16 %v107
    %v572 = vunpack.c.l.b16 %v108
    %v573 = vunpack.c.l.b16 %v109
    %v574 = vunpack.c.l.b16 %v110
    %v575 = vunpack.c.l.b16 %v111
    %v576 = vunpack.c.l.b16 %v112
    %v577 = vunpack.c.l.b16 %v113
    %v578 = vunpack.c.l.b16 %v114
    %v579 = vunpack.c.l.b16 %v115
    %v580 = vunpack.c.l.b16 %v116
    %v581 = vunpack.c.l.b16 %v117
    %v582 = vunpack.c.l.b16 %v118
    %v583 = vunpack.c.l.b16 %v119
    %v584 = vunpack.c.l.b16 %v120
    %v585 = vunpack.c.l.b16 %v121
    %v586 = vunpack.c.l.b16 %v122
    %v587 = vunpack.c.l.b16 %v123
    %v588 = vunpack.c.l.b16 %v124
    %v589 = vunpack.c.l.b16 %v125
    %v590 = vunpack.c.l.b16 %v126
    %v591 = vunpack.c.l.b16 %v127
    %v592 = vunpack.c.l.b16 %v128
    %v593 = vunpack.c.l.b16 %v129
    %v594 = vunpack.c.l.b16 %v130
    %v595 = vunpack.c.l.b16 %v131
    %v596 = vunpack.c.l.b16 %v132
    %v597 = vunpack.c.l.b16 %v133
    %v598 = vunpack.c.l.b16 %v134
    %v599 = vunpack.c.l.b16 %v135
    %v600 = vunpack.c.l.b16 %v136
    %v601 = vunpack.c.l.b16 %v137
    %v602 = vunpack.c.l.b16 %v138
    %v603 = vunpack.c.l.b16 %v139
    %v604 = vunpack.c.l.b16 %v140
    %v605 = vunpack.c.l.b16 %v141
    %v606 = vunpack.c.l.b16 %v142
    %v607 = vunpack.c.l.b16 %v143
    %v608 = vunpack.c.l.b16 %v144
    %v609 = vunpack.c.l.b16 %v145
    %v610 = vunpack.c.l.b16 %v146
    %v611 = vunpack.c.l.b16 %v147
    %v612 = vunpack.c.l.b16 %v148
    %v613 = vunpack.c.l.b16 %v149
    %v614 = vunpack.c.l.b16 %v150
    %v615 = vunpack.c.l.b16 %v151
    %v616 = vunpack.c.l.b16 %v152
    %v617 = vunpack.c.l.b16 %v153
    %v618 = vunpack.c.l.b16 %v154
    %v619 = vunpack.c.l.b16 %v155
    %v620 = vunpack.c.l.b16 %v156
    %v621 = vunpack.c.l.b16 %v157
    %v622 = vunpack.c.l.b16 %v158
    %v623 = vunpack.c.l.b16 %v159
    %v624 = vunpack.c.l.b16 %v160
    %v625 = vunpack.c.l.b16 %v161
    %v626 = vunpack.c.l.b16 %v162
    %v627 = vunpack.c.l.b16 %v163
    %v628 = vunpack.c.l.b16 %v164
    %v629 = vunpack.c.l.b16 %v165
    %v630 = vunpack.c.l.b16 %v166
    %v631 = vunpack.c.l.b16 %v167
    %v632 = vunpack.c.l.b16 %v168
    %v633 = vunpack.c.l.b16 %v169
    %v634 = vunpack.c.l.b16 %v170
    %v635 = vunpack.c.l.b16 %v171
    %v636 = vunpack.c.l.b16 %v172
    %v637 = vunpack.c.l.b16 %v173
    %v638 = vunpack.c.l.b16 %v174
    %v639 = vunpack.c.l.b16 %v175
    %v640 = vunpack.c.l.b16 %v176
    %v641 = vunpack.c.l.b16 %v177
    %v642 = vunpack.c.l.b16 %v178
    %v643 = vunpack.c.l.b16 %v179
    %v644 = vunpack.c.l.b16 %v180
    %v645 = vunpack.c.l.b16 %v181
    %v646 = vunpack.c.l.b16 %v182
    %v647 = vunpack.c.l.b16 %v183
    %v648 = vunpack.c.l.b16 %v184
    %v649 = vunpack.c.l.b16 %v185
    %v650 = vunpack.c.l.b16 %v186
    %v651 = vunpack.c.l.b16 %v187
    %v652 = vunpack.c.l.b16 %v188
    %v653 = vunpack.c.l.b16 %v189
    %v654 = vunpack.c.l.b16 %v190
    %v655 = vunpack.c.l.b16 %v191
    %v656 = vunpack.c.l.b16 %v192
    %v657 = vunpack.c.l.b16 %v193
    %v658 = vunpack.c.l.b16 %v194
    %v659 = vunpack.c.l.b16 %v195
    %v660 = vunpack.c.l.b16 %v196
    %v661 = vunpack.c.l.b16 %v197
    %v662 = vunpack.c.l.b16 %v198
    %v663 = vunpack.c.l.b16 %v199
    %v664 = vunpack.c.l.b16 %v200
    %v665 = vunpack.c.l.b16 %v201
    %v666 = vunpack.c.l.b16 %v202
    %v667 = vunpack.c.l.b16 %v203
    %v668 = vunpack.c.l.b16 %v204
    %v669 = vunpack.c.l.b16 %v205
    %v670 = vunpack.c.l.b16 %v206
    %v671 = vunpack.c.l.b16 %v207
    %v672 = vunpack.c.l.b16 %v208
    %v673 = vunpack.c.l.b16 %v209
    %v674 = vunpack.c.l.b16 %v210
    %v675 = vunpack.c.l.b16 %v211
    %v676 = vunpack.c.l.b16 %v212
    %v677 = vunpack.c.l.b16 %v213
    %v678 = vunpack.c.l.b16 %v214
    %v679 = vunpack.c.l.b16 %v215
    %v680 = vunpack.c.l.b16 %v216
    %v681 = vpack.c.b16 %v554, %v553
    %v682 = vpack.c.b16 %v556, %v555
    %v683 = vpack.c.b16 %v558, %v557
    %v684 = vpack.c.b16 %v560, %v559
    %v685 = vpack.c.b16 %v562, %v561
    %v686 = vpack.c.b16 %v564, %v563
    %v687 = vpack.c.b16 %v566, %v565
    %v688 = vpack.c.b16 %v568, %v567
    %v689 = vpack.c.b16 %v570, %v569
    %v690 = vpack.c.b16 %v572, %v571
    %v691 = vpack.c.b16 %v574, %v573
    %v692 = vpack.c.b16 %v576, %v575
    %v693 = vpack.c.b16 %v578, %v577
    %v694 = vpack.c.b16 %v580, %v579
    %v695 = vpack.c.b16 %v582, %v581
    %v696 = vpack.c.b16 %v584, %v583
    %v697 = vpack.c.b16 %v586, %v585
    %v698 = vpack.c.b16 %v588, %v587
    %v699 = vpack.c.b16 %v590, %v589
    %v700 = vpack.c.b16 %v592, %v591
    %v701 = vpack.c.b16 %v594, %v593
    %v702 = vpack.c.b16 %v596, %v595
    %v703 = vpack.c.b16 %v598, %v597
    %v704 = vpack.c.b16 %v600, %v599
    %v705 = vpack.c.b16 %v602, %v601
    %v706 = vpack.c.b16 %v604, %v603
    %v707 = vpack.c.b16 %v606, %v605
    %v708 = vpack.c.b16 %v608, %v607
    %v709 = vpack.c.b16 %v610, %v609
    %v710 = vpack.c.b16 %v612, %v611
    %v711 = vpack.c.b16 %v614, %v613
    %v712 = vpack.c.b16 %v616, %v615
    %v713 = vpack.c.b16 %v618, %v617
    %v714 = vpack.c.b16 %v620, %v619
    %v715 = vpack.c.b16 %v622, %v621
    %v716 = vpack.c.b16 %v624, %v623
    %v717 = vpack.c.b16 %v626, %v625
    %v718 = vpack.c.b16 %v628, %v627
    %v719 = vpack.c.b16 %v630, %v629
    %v720 = vpack.c.b16 %v632, %v631
    %v721 = vpack.c.b16 %v634, %v633
    %v722 = vpack.c.b16 %v636, %v635
    %v723 = vpack.c.b16 %v638, %v637
    %v724 = vpack.c.b16 %v640, %v639
    %v725 = vpack.c.b16 %v642, %v641
    %v726 = vpack.c.b16 %v644, %v643
    %v727 = vpack.c.b16 %v646, %v645
    %v728 = vpack.c.b16 %v648, %v647
    %v729 = vpack.c.b16 %v650, %v649
    %v730 = vpack.c.b16 %v652, %v651
    %v731 = vpack.c.b16 %v654, %v653
    %v732 = vpack.c.b16 %v656, %v655
    %v733 = vpack.c.b16 %v658, %v657
    %v734 = vpack.c.b16 %v660, %v659
    %v735 = vpack.c.b16 %v662, %v661
    %v736 = vpack.c.b16 %v664, %v663
    %v737 = vpack.c.b16 %v666, %v665
    %v738 = vpack.c.b16 %v668, %v667
    %v739 = vpack.c.b16 %v670, %v669
    %v740 = vpack.c.b16 %v672, %v671
    %v741 = vpack.c.b16 %v674, %v673
    %v742 = vpack.c.b16 %v676, %v675
    %v743 = vpack.c.b16 %v678, %v677
    %v744 = vpack.c.b16 %v680, %v679
    %809 = vmatpush.bf16.msra.mxu0 %v688
    %810 = vmatpush.bf16.msra.mxu0 %v687
    %811 = vmatpush.bf16.msra.mxu0 %v686
    %812 = vmatpush.bf16.msra.mxu0 %v685
    %813 = vmatpush.bf16.msra.mxu0 %v684
    %814 = vmatpush.bf16.msra.mxu0 %v683
    %815 = vmatpush.bf16.msra.mxu0 %v682
    %816 = vmatpush.bf16.msra.mxu0 %v681
    %817 = vmatmul.bf16.gmra.mxu0 %v409
    %v818 = vpop.f32.mrf.mxu0
    %v819 = vadd.f32 %v381, %v818
    %v820 = vpop.f32.mrf.mxu0
    %v821 = vadd.f32 %v383, %v820
    %822 = vdwg.mxu0
    %823 = vmatpush.bf16.msra.mxu0 %v696
    %824 = vmatpush.bf16.msra.mxu0 %v695
    %825 = vmatpush.bf16.msra.mxu0 %v694
    %826 = vmatpush.bf16.msra.mxu0 %v693
    %827 = vmatpush.bf16.msra.mxu0 %v692
    %828 = vmatpush.bf16.msra.mxu0 %v691
    %829 = vmatpush.bf16.msra.mxu0 %v690
    %830 = vmatpush.bf16.msra.mxu0 %v689
    %831 = vmatmul.bf16.gmra.mxu0 %v410
    %v832 = vpop.f32.mrf.mxu0
    %v833 = vadd.f32 %v819, %v832
    %v834 = vpop.f32.mrf.mxu0
    %v835 = vadd.f32 %v821, %v834
    %836 = vdwg.mxu0
    %837 = vmatpush.bf16.msra.mxu0 %v704
    %838 = vmatpush.bf16.msra.mxu0 %v703
    %839 = vmatpush.bf16.msra.mxu0 %v702
    %840 = vmatpush.bf16.msra.mxu0 %v701
    %841 = vmatpush.bf16.msra.mxu0 %v700
    %842 = vmatpush.bf16.msra.mxu0 %v699
    %843 = vmatpush.bf16.msra.mxu0 %v698
    %844 = vmatpush.bf16.msra.mxu0 %v697
    %845 = vmatmul.bf16.gmra.mxu0 %v411
    %v846 = vpop.f32.mrf.mxu0
    %v847 = vadd.f32 %v833, %v846
    %v848 = vpop.f32.mrf.mxu0
    %v849 = vadd.f32 %v835, %v848
    %850 = vdwg.mxu0
    %851 = vmatpush.bf16.msra.mxu0 %v712
    %852 = vmatpush.bf16.msra.mxu0 %v711
    %853 = vmatpush.bf16.msra.mxu0 %v710
    %854 = vmatpush.bf16.msra.mxu0 %v709
    %855 = vmatpush.bf16.msra.mxu0 %v708
    %856 = vmatpush.bf16.msra.mxu0 %v707
    %857 = vmatpush.bf16.msra.mxu0 %v706
    %858 = vmatpush.bf16.msra.mxu0 %v705
    %859 = vmatmul.bf16.gmra.mxu0 %v412
    %v860 = vpop.f32.mrf.mxu0
    %v861 = vadd.f32 %v847, %v860
    %v862 = vpop.f32.mrf.mxu0
    %v863 = vadd.f32 %v849, %v862
    %864 = vdwg.mxu0
    %865 = vmatpush.bf16.msra.mxu0 %v720
    %866 = vmatpush.bf16.msra.mxu0 %v719
    %867 = vmatpush.bf16.msra.mxu0 %v718
    %868 = vmatpush.bf16.msra.mxu0 %v717
    %869 = vmatpush.bf16.msra.mxu0 %v716
    %870 = vmatpush.bf16.msra.mxu0 %v715
    %871 = vmatpush.bf16.msra.mxu0 %v714
    %872 = vmatpush.bf16.msra.mxu0 %v713
    %873 = vmatmul.bf16.gmra.mxu0 %v413
    %v874 = vpop.f32.mrf.mxu0
    %v875 = vadd.f32 %v861, %v874
    %v876 = vpop.f32.mrf.mxu0
    %v877 = vadd.f32 %v863, %v876
    %878 = vdwg.mxu0
    %879 = vmatpush.bf16.msra.mxu0 %v728
    %880 = vmatpush.bf16.msra.mxu0 %v727
    %881 = vmatpush.bf16.msra.mxu0 %v726
    %882 = vmatpush.bf16.msra.mxu0 %v725
    %883 = vmatpush.bf16.msra.mxu0 %v724
    %884 = vmatpush.bf16.msra.mxu0 %v723
    %885 = vmatpush.bf16.msra.mxu0 %v722
    %886 = vmatpush.bf16.msra.mxu0 %v721
    %887 = vmatmul.bf16.gmra.mxu0 %v414
    %v888 = vpop.f32.mrf.mxu0
    %v889 = vadd.f32 %v875, %v888
    %v890 = vpop.f32.mrf.mxu0
    %v891 = vadd.f32 %v877, %v890
    %892 = vdwg.mxu0
    %893 = vmatpush.bf16.msra.mxu0 %v736
    %894 = vmatpush.bf16.msra.mxu0 %v735
    %895 = vmatpush.bf16.msra.mxu0 %v734
    %896 = vmatpush.bf16.msra.mxu0 %v733
    %897 = vmatpush.bf16.msra.mxu0 %v732
    %898 = vmatpush.bf16.msra.mxu0 %v731
    %899 = vmatpush.bf16.msra.mxu0 %v730
    %900 = vmatpush.bf16.msra.mxu0 %v729
    %901 = vmatmul.bf16.gmra.mxu0 %v415
    %v902 = vpop.f32.mrf.mxu0
    %v903 = vadd.f32 %v889, %v902
    %v904 = vpop.f32.mrf.mxu0
    %v905 = vadd.f32 %v891, %v904
    %906 = vdwg.mxu0
    %907 = vmatpush.bf16.msra.mxu0 %v744
    %908 = vmatpush.bf16.msra.mxu0 %v743
    %909 = vmatpush.bf16.msra.mxu0 %v742
    %910 = vmatpush.bf16.msra.mxu0 %v741
    %911 = vmatpush.bf16.msra.mxu0 %v740
    %912 = vmatpush.bf16.msra.mxu0 %v739
    %913 = vmatpush.bf16.msra.mxu0 %v738
    %914 = vmatpush.bf16.msra.mxu0 %v737
    %915 = vmatmul.bf16.gmra.mxu0 %v416
    %v916 = vpop.f32.mrf.mxu0
    %v917 = vadd.f32 %v903, %v916
    %v918 = vpop.f32.mrf.mxu0
    %v919 = vadd.f32 %v905, %v918
    %920 = vdwg.mxu0
    %921 = vst [vmem:[#allocation10] sm:$0xff] %v917
    %922 = vst [vmem:[#allocation10 + $0x8] sm:$0xff] %v919
    // Predicated region
    $region34: #{tpu_custom_call.1} parent=1 // pred_check
      _
    $region35: #{tpu_custom_call.1} parent=1 // pred_check_branch
      %924 = sbr.rel (0) target = $region37
    $region36: #{tpu_custom_call.1} parent=1 // pred_region
      %926 = vsyncadd [#allocation4], 0
      %s927 = sshll.u32 [#allocation10], 4
      %s928 = int_to_ptr.vmem [resolvable:$true] %s927
      %s929 = sshll.u32 %s4, 4
      %s930 = int_to_ptr.hbm [resolvable:$true] %s929
      %935 = dma.vmem_to_hbm [thread:$0]  %s928, 256, %s930, [#allocation4], 128, 128, 8
    $region37: #{tpu_custom_call.1} parent=1 // pred_fallthru
      _
    // Predicated region
    $region38: #{tpu_custom_call.1} parent=1 // pred_check
      _
    $region39: #{tpu_custom_call.1} parent=1 // pred_check_branch
      %937 = sbr.rel (0) target = $region41
    $region40: #{tpu_custom_call.1} parent=1 // pred_region
      %939 = dma.done [#allocation4], 256
    $region41: #{tpu_custom_call.1} parent=1 // pred_fallthru
      _
    %940 = vsyncpa [#allocation3], 1
    %941 = vsyncpa [#allocation6], 1
    %942 = vsyncpa [#allocation9], 1
    %943 = vsyncpa [#allocation4], 1

</llo_original>
